<compile_context>
chip_gen: v7x
topology: tpu7x:2x2x1
jax: 0.10.0
libtpu: 0.0.40
codegen_flags: <defaults>
</compile_context>

<pallas_src>
import jax
import jax.numpy as jnp
from jax.experimental import pallas as pl
from jax.experimental.pallas import tpu as pltpu


def _gather_kernel(idx_ref, w_hbm, out_ref, sem):
    """Gather `token_block` embedding rows straight from HBM into the output tile.

    idx_ref: SMEM (T_pad,) int32  -- all token indices (scalar prefetch)
    w_hbm:   HBM  (V, D)          -- embedding table, left in HBM (pl.ANY)
    out_ref: VMEM (TT, D)         -- pipelined output tile; row DMAs land here
    sem:     DMA semaphore shared by all row copies of this block
    """
    i = pl.program_id(0)
    tt = out_ref.shape[0]
    base = i * tt

    # Issue every row DMA first so they are all in flight concurrently.
    # (All SMEM scalar reads happen here, before any .wait().)
    for t in range(tt):
        row = idx_ref[base + t]
        pltpu.make_async_copy(w_hbm.at[row], out_ref.at[t], sem).start()

    # Wait for all of them.  Every copy is row-sized and signals the same
    # semaphore, so tt waits consume exactly tt completions; out_ref is only
    # handed to the pipeline writeback after the kernel body (i.e. after the
    # last wait), so the data is guaranteed resident.
    for t in range(tt):
        pltpu.make_async_copy(w_hbm.at[0], out_ref.at[t], sem).wait()


def embedding_forward(indices, weight, *, token_block=None):
    """indices: (N, W) int; weight: (V, D) -> (N, W, D) of weight.dtype."""
    n, w = indices.shape
    v, d = weight.shape
    t = n * w

    # Lane-dense rows: pad D up to a multiple of 128 (no-op when already
    # aligned; only pays a one-time table copy when it is not).
    d_pad = pl.cdiv(d, 128) * 128
    if d_pad != d:
        weight = jnp.pad(weight, ((0, 0), (0, d_pad - d)))

    if token_block is None:
        # Big enough to amortize per-grid-step overhead, bounded so the
        # double-buffered output tile stays tiny in VMEM.
        token_block = max(8, min(256, pl.cdiv(t, 8) * 8))
    assert token_block % 8 == 0, "token_block must be a multiple of 8"

    t_pad = pl.cdiv(t, token_block) * token_block

    flat_idx = indices.reshape(t).astype(jnp.int32)
    # Clamp so a bad index can never become an unchecked OOB DMA.
    flat_idx = jnp.clip(flat_idx, 0, v - 1)
    if t_pad != t:
        flat_idx = jnp.pad(flat_idx, (0, t_pad - t))  # ragged T supported

    out = pl.pallas_call(
        _gather_kernel,
        out_shape=jax.ShapeDtypeStruct((t_pad, d_pad), weight.dtype),
        grid_spec=pltpu.PrefetchScalarGridSpec(
            num_scalar_prefetch=1,                        # flat_idx -> SMEM
            grid=(t_pad // token_block,),
            in_specs=[
                pl.BlockSpec(memory_space=pl.ANY),        # table stays in HBM
            ],
            out_specs=pl.BlockSpec((token_block, d_pad), lambda i, idx: (i, 0)),
            scratch_shapes=[
                pltpu.SemaphoreType.DMA,
            ],
        ),
        compiler_params=pltpu.CompilerParams(
            dimension_semantics=("parallel",),            # shard tokens on v7x
        ),
    )(flat_idx, weight)

    return out[:t, :d].reshape(n, w, d)


if __name__ == "__main__":
    # Module hyper-parameters (small, deterministic).
    num_embeddings = 16
    embedding_dim = 128
    padding_idx = 0

    key = jax.random.PRNGKey(0)
    k_w, k_i = jax.random.split(key)

    # weight ~ N(0, 1), with padding_idx row zeroed (matches reset_parameters).
    weight = jax.random.normal(k_w, (num_embeddings, embedding_dim), jnp.float32)
    weight = weight.at[padding_idx].set(0.0)

    # Input: LongTensor (N, W) of indices, include padding_idx among them.
    n, w = 2, 8
    indices = jax.random.randint(k_i, (n, w), 0, num_embeddings, jnp.int32)
    indices = indices.at[0, 0].set(padding_idx)   # exercise padding row

    out = embedding_forward(indices, weight)
    out = jax.block_until_ready(out)

    # Reference check against a plain JAX gather (bit-exact: pure copy path).
    ref = jnp.take(weight, indices.reshape(-1), axis=0).reshape(n, w, embedding_dim)
    assert out.shape == (n, w, embedding_dim)
    assert bool(jnp.array_equal(out, ref)), "mismatch vs reference gather"
    assert bool(jnp.all(out[0, 0] == 0.0)), "padding_idx row must be zero"

    print("KERNEL_OK")
</pallas_src>

<mosaic_0001>
module attributes {stable_mosaic.version = 11 : i64} {
  func.func @_gather_kernel(%arg0: i32, %arg1: memref<16xi32, #tpu.memory_space<smem>>, %arg2: memref<16x128xf32, #tpu.memory_space<any>>, %arg3: memref<16x128xf32, #tpu.memory_space<vmem>>, %arg4: memref<!tpu.dma_semaphore, #tpu.memory_space<semaphore_mem>>) attributes {dimension_semantics = [#tpu.dimension_semantics<parallel>], iteration_bounds = array<i64: 1>, scalar_prefetch = 1 : i64, scratch_operands = 1 : i64, tpu.core_type = #tpu.core_type<tc>, window_params = [{}, {transform_indices = @transform_1, window_bounds = array<i64: 16, 128>}]} {
    %c16_i32 = arith.constant 16 : i32
    %0 = arith.muli %arg0, %c16_i32 : i32
    %c0_i32 = arith.constant 0 : i32
    %1 = arith.addi %0, %c0_i32 : i32
    %2 = arith.index_cast %1 : i32 to index
    %3 = memref.load %arg1[%2] : memref<16xi32, #tpu.memory_space<smem>>
    %c0_i32_0 = arith.constant 0 : i32
    %c0_i32_1 = arith.constant 0 : i32
    %4 = tpu.memref_slice %arg2[%3, %c0_i32_1] : memref<16x128xf32, #tpu.memory_space<any>> -> memref<1x128xf32, #tpu.memory_space<any>>
    %5 = tpu.memref_squeeze %4 : memref<1x128xf32, #tpu.memory_space<any>> -> memref<128xf32, #tpu.memory_space<any>>
    %c0_i32_2 = arith.constant 0 : i32
    %6 = tpu.memref_slice %arg3[%c0_i32_0, %c0_i32_2] : memref<16x128xf32, #tpu.memory_space<vmem>> -> memref<1x128xf32, #tpu.memory_space<vmem>>
    %7 = tpu.memref_squeeze %6 : memref<1x128xf32, #tpu.memory_space<vmem>> -> memref<128xf32, #tpu.memory_space<vmem>>
    tpu.enqueue_dma source(%5 : memref<128xf32, #tpu.memory_space<any>>) target(%7 : memref<128xf32, #tpu.memory_space<vmem>>) target_semaphore(%arg4 : memref<!tpu.dma_semaphore, #tpu.memory_space<semaphore_mem>>)
    %c1_i32 = arith.constant 1 : i32
    %8 = arith.addi %0, %c1_i32 : i32
    %9 = arith.index_cast %8 : i32 to index
    %10 = memref.load %arg1[%9] : memref<16xi32, #tpu.memory_space<smem>>
    %c1_i32_3 = arith.constant 1 : i32
    %c0_i32_4 = arith.constant 0 : i32
    %11 = tpu.memref_slice %arg2[%10, %c0_i32_4] : memref<16x128xf32, #tpu.memory_space<any>> -> memref<1x128xf32, #tpu.memory_space<any>>
    %12 = tpu.memref_squeeze %11 : memref<1x128xf32, #tpu.memory_space<any>> -> memref<128xf32, #tpu.memory_space<any>>
    %c0_i32_5 = arith.constant 0 : i32
    %13 = tpu.memref_slice %arg3[%c1_i32_3, %c0_i32_5] : memref<16x128xf32, #tpu.memory_space<vmem>> -> memref<1x128xf32, #tpu.memory_space<vmem>>
    %14 = tpu.memref_squeeze %13 : memref<1x128xf32, #tpu.memory_space<vmem>> -> memref<128xf32, #tpu.memory_space<vmem>>
    tpu.enqueue_dma source(%12 : memref<128xf32, #tpu.memory_space<any>>) target(%14 : memref<128xf32, #tpu.memory_space<vmem>>) target_semaphore(%arg4 : memref<!tpu.dma_semaphore, #tpu.memory_space<semaphore_mem>>)
    %c2_i32 = arith.constant 2 : i32
    %15 = arith.addi %0, %c2_i32 : i32
    %16 = arith.index_cast %15 : i32 to index
    %17 = memref.load %arg1[%16] : memref<16xi32, #tpu.memory_space<smem>>
    %c2_i32_6 = arith.constant 2 : i32
    %c0_i32_7 = arith.constant 0 : i32
    %18 = tpu.memref_slice %arg2[%17, %c0_i32_7] : memref<16x128xf32, #tpu.memory_space<any>> -> memref<1x128xf32, #tpu.memory_space<any>>
    %19 = tpu.memref_squeeze %18 : memref<1x128xf32, #tpu.memory_space<any>> -> memref<128xf32, #tpu.memory_space<any>>
    %c0_i32_8 = arith.constant 0 : i32
    %20 = tpu.memref_slice %arg3[%c2_i32_6, %c0_i32_8] : memref<16x128xf32, #tpu.memory_space<vmem>> -> memref<1x128xf32, #tpu.memory_space<vmem>>
    %21 = tpu.memref_squeeze %20 : memref<1x128xf32, #tpu.memory_space<vmem>> -> memref<128xf32, #tpu.memory_space<vmem>>
    tpu.enqueue_dma source(%19 : memref<128xf32, #tpu.memory_space<any>>) target(%21 : memref<128xf32, #tpu.memory_space<vmem>>) target_semaphore(%arg4 : memref<!tpu.dma_semaphore, #tpu.memory_space<semaphore_mem>>)
    %c3_i32 = arith.constant 3 : i32
    %22 = arith.addi %0, %c3_i32 : i32
    %23 = arith.index_cast %22 : i32 to index
    %24 = memref.load %arg1[%23] : memref<16xi32, #tpu.memory_space<smem>>
    %c3_i32_9 = arith.constant 3 : i32
    %c0_i32_10 = arith.constant 0 : i32
    %25 = tpu.memref_slice %arg2[%24, %c0_i32_10] : memref<16x128xf32, #tpu.memory_space<any>> -> memref<1x128xf32, #tpu.memory_space<any>>
    %26 = tpu.memref_squeeze %25 : memref<1x128xf32, #tpu.memory_space<any>> -> memref<128xf32, #tpu.memory_space<any>>
    %c0_i32_11 = arith.constant 0 : i32
    %27 = tpu.memref_slice %arg3[%c3_i32_9, %c0_i32_11] : memref<16x128xf32, #tpu.memory_space<vmem>> -> memref<1x128xf32, #tpu.memory_space<vmem>>
    %28 = tpu.memref_squeeze %27 : memref<1x128xf32, #tpu.memory_space<vmem>> -> memref<128xf32, #tpu.memory_space<vmem>>
    tpu.enqueue_dma source(%26 : memref<128xf32, #tpu.memory_space<any>>) target(%28 : memref<128xf32, #tpu.memory_space<vmem>>) target_semaphore(%arg4 : memref<!tpu.dma_semaphore, #tpu.memory_space<semaphore_mem>>)
    %c4_i32 = arith.constant 4 : i32
    %29 = arith.addi %0, %c4_i32 : i32
    %30 = arith.index_cast %29 : i32 to index
    %31 = memref.load %arg1[%30] : memref<16xi32, #tpu.memory_space<smem>>
    %c4_i32_12 = arith.constant 4 : i32
    %c0_i32_13 = arith.constant 0 : i32
    %32 = tpu.memref_slice %arg2[%31, %c0_i32_13] : memref<16x128xf32, #tpu.memory_space<any>> -> memref<1x128xf32, #tpu.memory_space<any>>
    %33 = tpu.memref_squeeze %32 : memref<1x128xf32, #tpu.memory_space<any>> -> memref<128xf32, #tpu.memory_space<any>>
    %c0_i32_14 = arith.constant 0 : i32
    %34 = tpu.memref_slice %arg3[%c4_i32_12, %c0_i32_14] : memref<16x128xf32, #tpu.memory_space<vmem>> -> memref<1x128xf32, #tpu.memory_space<vmem>>
    %35 = tpu.memref_squeeze %34 : memref<1x128xf32, #tpu.memory_space<vmem>> -> memref<128xf32, #tpu.memory_space<vmem>>
    tpu.enqueue_dma source(%33 : memref<128xf32, #tpu.memory_space<any>>) target(%35 : memref<128xf32, #tpu.memory_space<vmem>>) target_semaphore(%arg4 : memref<!tpu.dma_semaphore, #tpu.memory_space<semaphore_mem>>)
    %c5_i32 = arith.constant 5 : i32
    %36 = arith.addi %0, %c5_i32 : i32
    %37 = arith.index_cast %36 : i32 to index
    %38 = memref.load %arg1[%37] : memref<16xi32, #tpu.memory_space<smem>>
    %c5_i32_15 = arith.constant 5 : i32
    %c0_i32_16 = arith.constant 0 : i32
    %39 = tpu.memref_slice %arg2[%38, %c0_i32_16] : memref<16x128xf32, #tpu.memory_space<any>> -> memref<1x128xf32, #tpu.memory_space<any>>
    %40 = tpu.memref_squeeze %39 : memref<1x128xf32, #tpu.memory_space<any>> -> memref<128xf32, #tpu.memory_space<any>>
    %c0_i32_17 = arith.constant 0 : i32
    %41 = tpu.memref_slice %arg3[%c5_i32_15, %c0_i32_17] : memref<16x128xf32, #tpu.memory_space<vmem>> -> memref<1x128xf32, #tpu.memory_space<vmem>>
    %42 = tpu.memref_squeeze %41 : memref<1x128xf32, #tpu.memory_space<vmem>> -> memref<128xf32, #tpu.memory_space<vmem>>
    tpu.enqueue_dma source(%40 : memref<128xf32, #tpu.memory_space<any>>) target(%42 : memref<128xf32, #tpu.memory_space<vmem>>) target_semaphore(%arg4 : memref<!tpu.dma_semaphore, #tpu.memory_space<semaphore_mem>>)
    %c6_i32 = arith.constant 6 : i32
    %43 = arith.addi %0, %c6_i32 : i32
    %44 = arith.index_cast %43 : i32 to index
    %45 = memref.load %arg1[%44] : memref<16xi32, #tpu.memory_space<smem>>
    %c6_i32_18 = arith.constant 6 : i32
    %c0_i32_19 = arith.constant 0 : i32
    %46 = tpu.memref_slice %arg2[%45, %c0_i32_19] : memref<16x128xf32, #tpu.memory_space<any>> -> memref<1x128xf32, #tpu.memory_space<any>>
    %47 = tpu.memref_squeeze %46 : memref<1x128xf32, #tpu.memory_space<any>> -> memref<128xf32, #tpu.memory_space<any>>
    %c0_i32_20 = arith.constant 0 : i32
    %48 = tpu.memref_slice %arg3[%c6_i32_18, %c0_i32_20] : memref<16x128xf32, #tpu.memory_space<vmem>> -> memref<1x128xf32, #tpu.memory_space<vmem>>
    %49 = tpu.memref_squeeze %48 : memref<1x128xf32, #tpu.memory_space<vmem>> -> memref<128xf32, #tpu.memory_space<vmem>>
    tpu.enqueue_dma source(%47 : memref<128xf32, #tpu.memory_space<any>>) target(%49 : memref<128xf32, #tpu.memory_space<vmem>>) target_semaphore(%arg4 : memref<!tpu.dma_semaphore, #tpu.memory_space<semaphore_mem>>)
    %c7_i32 = arith.constant 7 : i32
    %50 = arith.addi %0, %c7_i32 : i32
    %51 = arith.index_cast %50 : i32 to index
    %52 = memref.load %arg1[%51] : memref<16xi32, #tpu.memory_space<smem>>
    %c7_i32_21 = arith.constant 7 : i32
    %c0_i32_22 = arith.constant 0 : i32
    %53 = tpu.memref_slice %arg2[%52, %c0_i32_22] : memref<16x128xf32, #tpu.memory_space<any>> -> memref<1x128xf32, #tpu.memory_space<any>>
    %54 = tpu.memref_squeeze %53 : memref<1x128xf32, #tpu.memory_space<any>> -> memref<128xf32, #tpu.memory_space<any>>
    %c0_i32_23 = arith.constant 0 : i32
    %55 = tpu.memref_slice %arg3[%c7_i32_21, %c0_i32_23] : memref<16x128xf32, #tpu.memory_space<vmem>> -> memref<1x128xf32, #tpu.memory_space<vmem>>
    %56 = tpu.memref_squeeze %55 : memref<1x128xf32, #tpu.memory_space<vmem>> -> memref<128xf32, #tpu.memory_space<vmem>>
    tpu.enqueue_dma source(%54 : memref<128xf32, #tpu.memory_space<any>>) target(%56 : memref<128xf32, #tpu.memory_space<vmem>>) target_semaphore(%arg4 : memref<!tpu.dma_semaphore, #tpu.memory_space<semaphore_mem>>)
    %c8_i32 = arith.constant 8 : i32
    %57 = arith.addi %0, %c8_i32 : i32
    %58 = arith.index_cast %57 : i32 to index
    %59 = memref.load %arg1[%58] : memref<16xi32, #tpu.memory_space<smem>>
    %c8_i32_24 = arith.constant 8 : i32
    %c0_i32_25 = arith.constant 0 : i32
    %60 = tpu.memref_slice %arg2[%59, %c0_i32_25] : memref<16x128xf32, #tpu.memory_space<any>> -> memref<1x128xf32, #tpu.memory_space<any>>
    %61 = tpu.memref_squeeze %60 : memref<1x128xf32, #tpu.memory_space<any>> -> memref<128xf32, #tpu.memory_space<any>>
    %c0_i32_26 = arith.constant 0 : i32
    %62 = tpu.memref_slice %arg3[%c8_i32_24, %c0_i32_26] : memref<16x128xf32, #tpu.memory_space<vmem>> -> memref<1x128xf32, #tpu.memory_space<vmem>>
    %63 = tpu.memref_squeeze %62 : memref<1x128xf32, #tpu.memory_space<vmem>> -> memref<128xf32, #tpu.memory_space<vmem>>
    tpu.enqueue_dma source(%61 : memref<128xf32, #tpu.memory_space<any>>) target(%63 : memref<128xf32, #tpu.memory_space<vmem>>) target_semaphore(%arg4 : memref<!tpu.dma_semaphore, #tpu.memory_space<semaphore_mem>>)
    %c9_i32 = arith.constant 9 : i32
    %64 = arith.addi %0, %c9_i32 : i32
    %65 = arith.index_cast %64 : i32 to index
    %66 = memref.load %arg1[%65] : memref<16xi32, #tpu.memory_space<smem>>
    %c9_i32_27 = arith.constant 9 : i32
    %c0_i32_28 = arith.constant 0 : i32
    %67 = tpu.memref_slice %arg2[%66, %c0_i32_28] : memref<16x128xf32, #tpu.memory_space<any>> -> memref<1x128xf32, #tpu.memory_space<any>>
    %68 = tpu.memref_squeeze %67 : memref<1x128xf32, #tpu.memory_space<any>> -> memref<128xf32, #tpu.memory_space<any>>
    %c0_i32_29 = arith.constant 0 : i32
    %69 = tpu.memref_slice %arg3[%c9_i32_27, %c0_i32_29] : memref<16x128xf32, #tpu.memory_space<vmem>> -> memref<1x128xf32, #tpu.memory_space<vmem>>
    %70 = tpu.memref_squeeze %69 : memref<1x128xf32, #tpu.memory_space<vmem>> -> memref<128xf32, #tpu.memory_space<vmem>>
    tpu.enqueue_dma source(%68 : memref<128xf32, #tpu.memory_space<any>>) target(%70 : memref<128xf32, #tpu.memory_space<vmem>>) target_semaphore(%arg4 : memref<!tpu.dma_semaphore, #tpu.memory_space<semaphore_mem>>)
    %c10_i32 = arith.constant 10 : i32
    %71 = arith.addi %0, %c10_i32 : i32
    %72 = arith.index_cast %71 : i32 to index
    %73 = memref.load %arg1[%72] : memref<16xi32, #tpu.memory_space<smem>>
    %c10_i32_30 = arith.constant 10 : i32
    %c0_i32_31 = arith.constant 0 : i32
    %74 = tpu.memref_slice %arg2[%73, %c0_i32_31] : memref<16x128xf32, #tpu.memory_space<any>> -> memref<1x128xf32, #tpu.memory_space<any>>
    %75 = tpu.memref_squeeze %74 : memref<1x128xf32, #tpu.memory_space<any>> -> memref<128xf32, #tpu.memory_space<any>>
    %c0_i32_32 = arith.constant 0 : i32
    %76 = tpu.memref_slice %arg3[%c10_i32_30, %c0_i32_32] : memref<16x128xf32, #tpu.memory_space<vmem>> -> memref<1x128xf32, #tpu.memory_space<vmem>>
    %77 = tpu.memref_squeeze %76 : memref<1x128xf32, #tpu.memory_space<vmem>> -> memref<128xf32, #tpu.memory_space<vmem>>
    tpu.enqueue_dma source(%75 : memref<128xf32, #tpu.memory_space<any>>) target(%77 : memref<128xf32, #tpu.memory_space<vmem>>) target_semaphore(%arg4 : memref<!tpu.dma_semaphore, #tpu.memory_space<semaphore_mem>>)
    %c11_i32 = arith.constant 11 : i32
    %78 = arith.addi %0, %c11_i32 : i32
    %79 = arith.index_cast %78 : i32 to index
    %80 = memref.load %arg1[%79] : memref<16xi32, #tpu.memory_space<smem>>
    %c11_i32_33 = arith.constant 11 : i32
    %c0_i32_34 = arith.constant 0 : i32
    %81 = tpu.memref_slice %arg2[%80, %c0_i32_34] : memref<16x128xf32, #tpu.memory_space<any>> -> memref<1x128xf32, #tpu.memory_space<any>>
    %82 = tpu.memref_squeeze %81 : memref<1x128xf32, #tpu.memory_space<any>> -> memref<128xf32, #tpu.memory_space<any>>
    %c0_i32_35 = arith.constant 0 : i32
    %83 = tpu.memref_slice %arg3[%c11_i32_33, %c0_i32_35] : memref<16x128xf32, #tpu.memory_space<vmem>> -> memref<1x128xf32, #tpu.memory_space<vmem>>
    %84 = tpu.memref_squeeze %83 : memref<1x128xf32, #tpu.memory_space<vmem>> -> memref<128xf32, #tpu.memory_space<vmem>>
    tpu.enqueue_dma source(%82 : memref<128xf32, #tpu.memory_space<any>>) target(%84 : memref<128xf32, #tpu.memory_space<vmem>>) target_semaphore(%arg4 : memref<!tpu.dma_semaphore, #tpu.memory_space<semaphore_mem>>)
    %c12_i32 = arith.constant 12 : i32
    %85 = arith.addi %0, %c12_i32 : i32
    %86 = arith.index_cast %85 : i32 to index
    %87 = memref.load %arg1[%86] : memref<16xi32, #tpu.memory_space<smem>>
    %c12_i32_36 = arith.constant 12 : i32
    %c0_i32_37 = arith.constant 0 : i32
    %88 = tpu.memref_slice %arg2[%87, %c0_i32_37] : memref<16x128xf32, #tpu.memory_space<any>> -> memref<1x128xf32, #tpu.memory_space<any>>
    %89 = tpu.memref_squeeze %88 : memref<1x128xf32, #tpu.memory_space<any>> -> memref<128xf32, #tpu.memory_space<any>>
    %c0_i32_38 = arith.constant 0 : i32
    %90 = tpu.memref_slice %arg3[%c12_i32_36, %c0_i32_38] : memref<16x128xf32, #tpu.memory_space<vmem>> -> memref<1x128xf32, #tpu.memory_space<vmem>>
    %91 = tpu.memref_squeeze %90 : memref<1x128xf32, #tpu.memory_space<vmem>> -> memref<128xf32, #tpu.memory_space<vmem>>
    tpu.enqueue_dma source(%89 : memref<128xf32, #tpu.memory_space<any>>) target(%91 : memref<128xf32, #tpu.memory_space<vmem>>) target_semaphore(%arg4 : memref<!tpu.dma_semaphore, #tpu.memory_space<semaphore_mem>>)
    %c13_i32 = arith.constant 13 : i32
    %92 = arith.addi %0, %c13_i32 : i32
    %93 = arith.index_cast %92 : i32 to index
    %94 = memref.load %arg1[%93] : memref<16xi32, #tpu.memory_space<smem>>
    %c13_i32_39 = arith.constant 13 : i32
    %c0_i32_40 = arith.constant 0 : i32
    %95 = tpu.memref_slice %arg2[%94, %c0_i32_40] : memref<16x128xf32, #tpu.memory_space<any>> -> memref<1x128xf32, #tpu.memory_space<any>>
    %96 = tpu.memref_squeeze %95 : memref<1x128xf32, #tpu.memory_space<any>> -> memref<128xf32, #tpu.memory_space<any>>
    %c0_i32_41 = arith.constant 0 : i32
    %97 = tpu.memref_slice %arg3[%c13_i32_39, %c0_i32_41] : memref<16x128xf32, #tpu.memory_space<vmem>> -> memref<1x128xf32, #tpu.memory_space<vmem>>
    %98 = tpu.memref_squeeze %97 : memref<1x128xf32, #tpu.memory_space<vmem>> -> memref<128xf32, #tpu.memory_space<vmem>>
    tpu.enqueue_dma source(%96 : memref<128xf32, #tpu.memory_space<any>>) target(%98 : memref<128xf32, #tpu.memory_space<vmem>>) target_semaphore(%arg4 : memref<!tpu.dma_semaphore, #tpu.memory_space<semaphore_mem>>)
    %c14_i32 = arith.constant 14 : i32
    %99 = arith.addi %0, %c14_i32 : i32
    %100 = arith.index_cast %99 : i32 to index
    %101 = memref.load %arg1[%100] : memref<16xi32, #tpu.memory_space<smem>>
    %c14_i32_42 = arith.constant 14 : i32
    %c0_i32_43 = arith.constant 0 : i32
    %102 = tpu.memref_slice %arg2[%101, %c0_i32_43] : memref<16x128xf32, #tpu.memory_space<any>> -> memref<1x128xf32, #tpu.memory_space<any>>
    %103 = tpu.memref_squeeze %102 : memref<1x128xf32, #tpu.memory_space<any>> -> memref<128xf32, #tpu.memory_space<any>>
    %c0_i32_44 = arith.constant 0 : i32
    %104 = tpu.memref_slice %arg3[%c14_i32_42, %c0_i32_44] : memref<16x128xf32, #tpu.memory_space<vmem>> -> memref<1x128xf32, #tpu.memory_space<vmem>>
    %105 = tpu.memref_squeeze %104 : memref<1x128xf32, #tpu.memory_space<vmem>> -> memref<128xf32, #tpu.memory_space<vmem>>
    tpu.enqueue_dma source(%103 : memref<128xf32, #tpu.memory_space<any>>) target(%105 : memref<128xf32, #tpu.memory_space<vmem>>) target_semaphore(%arg4 : memref<!tpu.dma_semaphore, #tpu.memory_space<semaphore_mem>>)
    %c15_i32 = arith.constant 15 : i32
    %106 = arith.addi %0, %c15_i32 : i32
    %107 = arith.index_cast %106 : i32 to index
    %108 = memref.load %arg1[%107] : memref<16xi32, #tpu.memory_space<smem>>
    %c15_i32_45 = arith.constant 15 : i32
    %c0_i32_46 = arith.constant 0 : i32
    %109 = tpu.memref_slice %arg2[%108, %c0_i32_46] : memref<16x128xf32, #tpu.memory_space<any>> -> memref<1x128xf32, #tpu.memory_space<any>>
    %110 = tpu.memref_squeeze %109 : memref<1x128xf32, #tpu.memory_space<any>> -> memref<128xf32, #tpu.memory_space<any>>
    %c0_i32_47 = arith.constant 0 : i32
    %111 = tpu.memref_slice %arg3[%c15_i32_45, %c0_i32_47] : memref<16x128xf32, #tpu.memory_space<vmem>> -> memref<1x128xf32, #tpu.memory_space<vmem>>
    %112 = tpu.memref_squeeze %111 : memref<1x128xf32, #tpu.memory_space<vmem>> -> memref<128xf32, #tpu.memory_space<vmem>>
    tpu.enqueue_dma source(%110 : memref<128xf32, #tpu.memory_space<any>>) target(%112 : memref<128xf32, #tpu.memory_space<vmem>>) target_semaphore(%arg4 : memref<!tpu.dma_semaphore, #tpu.memory_space<semaphore_mem>>)
    %c0_i32_48 = arith.constant 0 : i32
    %c0_i32_49 = arith.constant 0 : i32
    %c0_i32_50 = arith.constant 0 : i32
    %113 = tpu.memref_slice %arg2[%c0_i32_48, %c0_i32_50] : memref<16x128xf32, #tpu.memory_space<any>> -> memref<1x128xf32, #tpu.memory_space<any>>
    %114 = tpu.memref_squeeze %113 : memref<1x128xf32, #tpu.memory_space<any>> -> memref<128xf32, #tpu.memory_space<any>>
    %c0_i32_51 = arith.constant 0 : i32
    %115 = tpu.memref_slice %arg3[%c0_i32_49, %c0_i32_51] : memref<16x128xf32, #tpu.memory_space<vmem>> -> memref<1x128xf32, #tpu.memory_space<vmem>>
    %116 = tpu.memref_squeeze %115 : memref<1x128xf32, #tpu.memory_space<vmem>> -> memref<128xf32, #tpu.memory_space<vmem>>
    tpu.wait_dma2 semaphore(%arg4 : memref<!tpu.dma_semaphore, #tpu.memory_space<semaphore_mem>>) src(%114 : memref<128xf32, #tpu.memory_space<any>>) dst(%116 : memref<128xf32, #tpu.memory_space<vmem>>)
    %c0_i32_52 = arith.constant 0 : i32
    %c1_i32_53 = arith.constant 1 : i32
    %c0_i32_54 = arith.constant 0 : i32
    %117 = tpu.memref_slice %arg2[%c0_i32_52, %c0_i32_54] : memref<16x128xf32, #tpu.memory_space<any>> -> memref<1x128xf32, #tpu.memory_space<any>>
    %118 = tpu.memref_squeeze %117 : memref<1x128xf32, #tpu.memory_space<any>> -> memref<128xf32, #tpu.memory_space<any>>
    %c0_i32_55 = arith.constant 0 : i32
    %119 = tpu.memref_slice %arg3[%c1_i32_53, %c0_i32_55] : memref<16x128xf32, #tpu.memory_space<vmem>> -> memref<1x128xf32, #tpu.memory_space<vmem>>
    %120 = tpu.memref_squeeze %119 : memref<1x128xf32, #tpu.memory_space<vmem>> -> memref<128xf32, #tpu.memory_space<vmem>>
    tpu.wait_dma2 semaphore(%arg4 : memref<!tpu.dma_semaphore, #tpu.memory_space<semaphore_mem>>) src(%118 : memref<128xf32, #tpu.memory_space<any>>) dst(%120 : memref<128xf32, #tpu.memory_space<vmem>>)
    %c0_i32_56 = arith.constant 0 : i32
    %c2_i32_57 = arith.constant 2 : i32
    %c0_i32_58 = arith.constant 0 : i32
    %121 = tpu.memref_slice %arg2[%c0_i32_56, %c0_i32_58] : memref<16x128xf32, #tpu.memory_space<any>> -> memref<1x128xf32, #tpu.memory_space<any>>
    %122 = tpu.memref_squeeze %121 : memref<1x128xf32, #tpu.memory_space<any>> -> memref<128xf32, #tpu.memory_space<any>>
    %c0_i32_59 = arith.constant 0 : i32
    %123 = tpu.memref_slice %arg3[%c2_i32_57, %c0_i32_59] : memref<16x128xf32, #tpu.memory_space<vmem>> -> memref<1x128xf32, #tpu.memory_space<vmem>>
    %124 = tpu.memref_squeeze %123 : memref<1x128xf32, #tpu.memory_space<vmem>> -> memref<128xf32, #tpu.memory_space<vmem>>
    tpu.wait_dma2 semaphore(%arg4 : memref<!tpu.dma_semaphore, #tpu.memory_space<semaphore_mem>>) src(%122 : memref<128xf32, #tpu.memory_space<any>>) dst(%124 : memref<128xf32, #tpu.memory_space<vmem>>)
    %c0_i32_60 = arith.constant 0 : i32
    %c3_i32_61 = arith.constant 3 : i32
    %c0_i32_62 = arith.constant 0 : i32
    %125 = tpu.memref_slice %arg2[%c0_i32_60, %c0_i32_62] : memref<16x128xf32, #tpu.memory_space<any>> -> memref<1x128xf32, #tpu.memory_space<any>>
    %126 = tpu.memref_squeeze %125 : memref<1x128xf32, #tpu.memory_space<any>> -> memref<128xf32, #tpu.memory_space<any>>
    %c0_i32_63 = arith.constant 0 : i32
    %127 = tpu.memref_slice %arg3[%c3_i32_61, %c0_i32_63] : memref<16x128xf32, #tpu.memory_space<vmem>> -> memref<1x128xf32, #tpu.memory_space<vmem>>
    %128 = tpu.memref_squeeze %127 : memref<1x128xf32, #tpu.memory_space<vmem>> -> memref<128xf32, #tpu.memory_space<vmem>>
    tpu.wait_dma2 semaphore(%arg4 : memref<!tpu.dma_semaphore, #tpu.memory_space<semaphore_mem>>) src(%126 : memref<128xf32, #tpu.memory_space<any>>) dst(%128 : memref<128xf32, #tpu.memory_space<vmem>>)
    %c0_i32_64 = arith.constant 0 : i32
    %c4_i32_65 = arith.constant 4 : i32
    %c0_i32_66 = arith.constant 0 : i32
    %129 = tpu.memref_slice %arg2[%c0_i32_64, %c0_i32_66] : memref<16x128xf32, #tpu.memory_space<any>> -> memref<1x128xf32, #tpu.memory_space<any>>
    %130 = tpu.memref_squeeze %129 : memref<1x128xf32, #tpu.memory_space<any>> -> memref<128xf32, #tpu.memory_space<any>>
    %c0_i32_67 = arith.constant 0 : i32
    %131 = tpu.memref_slice %arg3[%c4_i32_65, %c0_i32_67] : memref<16x128xf32, #tpu.memory_space<vmem>> -> memref<1x128xf32, #tpu.memory_space<vmem>>
    %132 = tpu.memref_squeeze %131 : memref<1x128xf32, #tpu.memory_space<vmem>> -> memref<128xf32, #tpu.memory_space<vmem>>
    tpu.wait_dma2 semaphore(%arg4 : memref<!tpu.dma_semaphore, #tpu.memory_space<semaphore_mem>>) src(%130 : memref<128xf32, #tpu.memory_space<any>>) dst(%132 : memref<128xf32, #tpu.memory_space<vmem>>)
    %c0_i32_68 = arith.constant 0 : i32
    %c5_i32_69 = arith.constant 5 : i32
    %c0_i32_70 = arith.constant 0 : i32
    %133 = tpu.memref_slice %arg2[%c0_i32_68, %c0_i32_70] : memref<16x128xf32, #tpu.memory_space<any>> -> memref<1x128xf32, #tpu.memory_space<any>>
    %134 = tpu.memref_squeeze %133 : memref<1x128xf32, #tpu.memory_space<any>> -> memref<128xf32, #tpu.memory_space<any>>
    %c0_i32_71 = arith.constant 0 : i32
    %135 = tpu.memref_slice %arg3[%c5_i32_69, %c0_i32_71] : memref<16x128xf32, #tpu.memory_space<vmem>> -> memref<1x128xf32, #tpu.memory_space<vmem>>
    %136 = tpu.memref_squeeze %135 : memref<1x128xf32, #tpu.memory_space<vmem>> -> memref<128xf32, #tpu.memory_space<vmem>>
    tpu.wait_dma2 semaphore(%arg4 : memref<!tpu.dma_semaphore, #tpu.memory_space<semaphore_mem>>) src(%134 : memref<128xf32, #tpu.memory_space<any>>) dst(%136 : memref<128xf32, #tpu.memory_space<vmem>>)
    %c0_i32_72 = arith.constant 0 : i32
    %c6_i32_73 = arith.constant 6 : i32
    %c0_i32_74 = arith.constant 0 : i32
    %137 = tpu.memref_slice %arg2[%c0_i32_72, %c0_i32_74] : memref<16x128xf32, #tpu.memory_space<any>> -> memref<1x128xf32, #tpu.memory_space<any>>
    %138 = tpu.memref_squeeze %137 : memref<1x128xf32, #tpu.memory_space<any>> -> memref<128xf32, #tpu.memory_space<any>>
    %c0_i32_75 = arith.constant 0 : i32
    %139 = tpu.memref_slice %arg3[%c6_i32_73, %c0_i32_75] : memref<16x128xf32, #tpu.memory_space<vmem>> -> memref<1x128xf32, #tpu.memory_space<vmem>>
    %140 = tpu.memref_squeeze %139 : memref<1x128xf32, #tpu.memory_space<vmem>> -> memref<128xf32, #tpu.memory_space<vmem>>
    tpu.wait_dma2 semaphore(%arg4 : memref<!tpu.dma_semaphore, #tpu.memory_space<semaphore_mem>>) src(%138 : memref<128xf32, #tpu.memory_space<any>>) dst(%140 : memref<128xf32, #tpu.memory_space<vmem>>)
    %c0_i32_76 = arith.constant 0 : i32
    %c7_i32_77 = arith.constant 7 : i32
    %c0_i32_78 = arith.constant 0 : i32
    %141 = tpu.memref_slice %arg2[%c0_i32_76, %c0_i32_78] : memref<16x128xf32, #tpu.memory_space<any>> -> memref<1x128xf32, #tpu.memory_space<any>>
    %142 = tpu.memref_squeeze %141 : memref<1x128xf32, #tpu.memory_space<any>> -> memref<128xf32, #tpu.memory_space<any>>
    %c0_i32_79 = arith.constant 0 : i32
    %143 = tpu.memref_slice %arg3[%c7_i32_77, %c0_i32_79] : memref<16x128xf32, #tpu.memory_space<vmem>> -> memref<1x128xf32, #tpu.memory_space<vmem>>
    %144 = tpu.memref_squeeze %143 : memref<1x128xf32, #tpu.memory_space<vmem>> -> memref<128xf32, #tpu.memory_space<vmem>>
    tpu.wait_dma2 semaphore(%arg4 : memref<!tpu.dma_semaphore, #tpu.memory_space<semaphore_mem>>) src(%142 : memref<128xf32, #tpu.memory_space<any>>) dst(%144 : memref<128xf32, #tpu.memory_space<vmem>>)
    %c0_i32_80 = arith.constant 0 : i32
    %c8_i32_81 = arith.constant 8 : i32
    %c0_i32_82 = arith.constant 0 : i32
    %145 = tpu.memref_slice %arg2[%c0_i32_80, %c0_i32_82] : memref<16x128xf32, #tpu.memory_space<any>> -> memref<1x128xf32, #tpu.memory_space<any>>
    %146 = tpu.memref_squeeze %145 : memref<1x128xf32, #tpu.memory_space<any>> -> memref<128xf32, #tpu.memory_space<any>>
    %c0_i32_83 = arith.constant 0 : i32
    %147 = tpu.memref_slice %arg3[%c8_i32_81, %c0_i32_83] : memref<16x128xf32, #tpu.memory_space<vmem>> -> memref<1x128xf32, #tpu.memory_space<vmem>>
    %148 = tpu.memref_squeeze %147 : memref<1x128xf32, #tpu.memory_space<vmem>> -> memref<128xf32, #tpu.memory_space<vmem>>
    tpu.wait_dma2 semaphore(%arg4 : memref<!tpu.dma_semaphore, #tpu.memory_space<semaphore_mem>>) src(%146 : memref<128xf32, #tpu.memory_space<any>>) dst(%148 : memref<128xf32, #tpu.memory_space<vmem>>)
    %c0_i32_84 = arith.constant 0 : i32
    %c9_i32_85 = arith.constant 9 : i32
    %c0_i32_86 = arith.constant 0 : i32
    %149 = tpu.memref_slice %arg2[%c0_i32_84, %c0_i32_86] : memref<16x128xf32, #tpu.memory_space<any>> -> memref<1x128xf32, #tpu.memory_space<any>>
    %150 = tpu.memref_squeeze %149 : memref<1x128xf32, #tpu.memory_space<any>> -> memref<128xf32, #tpu.memory_space<any>>
    %c0_i32_87 = arith.constant 0 : i32
    %151 = tpu.memref_slice %arg3[%c9_i32_85, %c0_i32_87] : memref<16x128xf32, #tpu.memory_space<vmem>> -> memref<1x128xf32, #tpu.memory_space<vmem>>
    %152 = tpu.memref_squeeze %151 : memref<1x128xf32, #tpu.memory_space<vmem>> -> memref<128xf32, #tpu.memory_space<vmem>>
    tpu.wait_dma2 semaphore(%arg4 : memref<!tpu.dma_semaphore, #tpu.memory_space<semaphore_mem>>) src(%150 : memref<128xf32, #tpu.memory_space<any>>) dst(%152 : memref<128xf32, #tpu.memory_space<vmem>>)
    %c0_i32_88 = arith.constant 0 : i32
    %c10_i32_89 = arith.constant 10 : i32
    %c0_i32_90 = arith.constant 0 : i32
    %153 = tpu.memref_slice %arg2[%c0_i32_88, %c0_i32_90] : memref<16x128xf32, #tpu.memory_space<any>> -> memref<1x128xf32, #tpu.memory_space<any>>
    %154 = tpu.memref_squeeze %153 : memref<1x128xf32, #tpu.memory_space<any>> -> memref<128xf32, #tpu.memory_space<any>>
    %c0_i32_91 = arith.constant 0 : i32
    %155 = tpu.memref_slice %arg3[%c10_i32_89, %c0_i32_91] : memref<16x128xf32, #tpu.memory_space<vmem>> -> memref<1x128xf32, #tpu.memory_space<vmem>>
    %156 = tpu.memref_squeeze %155 : memref<1x128xf32, #tpu.memory_space<vmem>> -> memref<128xf32, #tpu.memory_space<vmem>>
    tpu.wait_dma2 semaphore(%arg4 : memref<!tpu.dma_semaphore, #tpu.memory_space<semaphore_mem>>) src(%154 : memref<128xf32, #tpu.memory_space<any>>) dst(%156 : memref<128xf32, #tpu.memory_space<vmem>>)
    %c0_i32_92 = arith.constant 0 : i32
    %c11_i32_93 = arith.constant 11 : i32
    %c0_i32_94 = arith.constant 0 : i32
    %157 = tpu.memref_slice %arg2[%c0_i32_92, %c0_i32_94] : memref<16x128xf32, #tpu.memory_space<any>> -> memref<1x128xf32, #tpu.memory_space<any>>
    %158 = tpu.memref_squeeze %157 : memref<1x128xf32, #tpu.memory_space<any>> -> memref<128xf32, #tpu.memory_space<any>>
    %c0_i32_95 = arith.constant 0 : i32
    %159 = tpu.memref_slice %arg3[%c11_i32_93, %c0_i32_95] : memref<16x128xf32, #tpu.memory_space<vmem>> -> memref<1x128xf32, #tpu.memory_space<vmem>>
    %160 = tpu.memref_squeeze %159 : memref<1x128xf32, #tpu.memory_space<vmem>> -> memref<128xf32, #tpu.memory_space<vmem>>
    tpu.wait_dma2 semaphore(%arg4 : memref<!tpu.dma_semaphore, #tpu.memory_space<semaphore_mem>>) src(%158 : memref<128xf32, #tpu.memory_space<any>>) dst(%160 : memref<128xf32, #tpu.memory_space<vmem>>)
    %c0_i32_96 = arith.constant 0 : i32
    %c12_i32_97 = arith.constant 12 : i32
    %c0_i32_98 = arith.constant 0 : i32
    %161 = tpu.memref_slice %arg2[%c0_i32_96, %c0_i32_98] : memref<16x128xf32, #tpu.memory_space<any>> -> memref<1x128xf32, #tpu.memory_space<any>>
    %162 = tpu.memref_squeeze %161 : memref<1x128xf32, #tpu.memory_space<any>> -> memref<128xf32, #tpu.memory_space<any>>
    %c0_i32_99 = arith.constant 0 : i32
    %163 = tpu.memref_slice %arg3[%c12_i32_97, %c0_i32_99] : memref<16x128xf32, #tpu.memory_space<vmem>> -> memref<1x128xf32, #tpu.memory_space<vmem>>
    %164 = tpu.memref_squeeze %163 : memref<1x128xf32, #tpu.memory_space<vmem>> -> memref<128xf32, #tpu.memory_space<vmem>>
    tpu.wait_dma2 semaphore(%arg4 : memref<!tpu.dma_semaphore, #tpu.memory_space<semaphore_mem>>) src(%162 : memref<128xf32, #tpu.memory_space<any>>) dst(%164 : memref<128xf32, #tpu.memory_space<vmem>>)
    %c0_i32_100 = arith.constant 0 : i32
    %c13_i32_101 = arith.constant 13 : i32
    %c0_i32_102 = arith.constant 0 : i32
    %165 = tpu.memref_slice %arg2[%c0_i32_100, %c0_i32_102] : memref<16x128xf32, #tpu.memory_space<any>> -> memref<1x128xf32, #tpu.memory_space<any>>
    %166 = tpu.memref_squeeze %165 : memref<1x128xf32, #tpu.memory_space<any>> -> memref<128xf32, #tpu.memory_space<any>>
    %c0_i32_103 = arith.constant 0 : i32
    %167 = tpu.memref_slice %arg3[%c13_i32_101, %c0_i32_103] : memref<16x128xf32, #tpu.memory_space<vmem>> -> memref<1x128xf32, #tpu.memory_space<vmem>>
    %168 = tpu.memref_squeeze %167 : memref<1x128xf32, #tpu.memory_space<vmem>> -> memref<128xf32, #tpu.memory_space<vmem>>
    tpu.wait_dma2 semaphore(%arg4 : memref<!tpu.dma_semaphore, #tpu.memory_space<semaphore_mem>>) src(%166 : memref<128xf32, #tpu.memory_space<any>>) dst(%168 : memref<128xf32, #tpu.memory_space<vmem>>)
    %c0_i32_104 = arith.constant 0 : i32
    %c14_i32_105 = arith.constant 14 : i32
    %c0_i32_106 = arith.constant 0 : i32
    %169 = tpu.memref_slice %arg2[%c0_i32_104, %c0_i32_106] : memref<16x128xf32, #tpu.memory_space<any>> -> memref<1x128xf32, #tpu.memory_space<any>>
    %170 = tpu.memref_squeeze %169 : memref<1x128xf32, #tpu.memory_space<any>> -> memref<128xf32, #tpu.memory_space<any>>
    %c0_i32_107 = arith.constant 0 : i32
    %171 = tpu.memref_slice %arg3[%c14_i32_105, %c0_i32_107] : memref<16x128xf32, #tpu.memory_space<vmem>> -> memref<1x128xf32, #tpu.memory_space<vmem>>
    %172 = tpu.memref_squeeze %171 : memref<1x128xf32, #tpu.memory_space<vmem>> -> memref<128xf32, #tpu.memory_space<vmem>>
    tpu.wait_dma2 semaphore(%arg4 : memref<!tpu.dma_semaphore, #tpu.memory_space<semaphore_mem>>) src(%170 : memref<128xf32, #tpu.memory_space<any>>) dst(%172 : memref<128xf32, #tpu.memory_space<vmem>>)
    %c0_i32_108 = arith.constant 0 : i32
    %c15_i32_109 = arith.constant 15 : i32
    %c0_i32_110 = arith.constant 0 : i32
    %173 = tpu.memref_slice %arg2[%c0_i32_108, %c0_i32_110] : memref<16x128xf32, #tpu.memory_space<any>> -> memref<1x128xf32, #tpu.memory_space<any>>
    %174 = tpu.memref_squeeze %173 : memref<1x128xf32, #tpu.memory_space<any>> -> memref<128xf32, #tpu.memory_space<any>>
    %c0_i32_111 = arith.constant 0 : i32
    %175 = tpu.memref_slice %arg3[%c15_i32_109, %c0_i32_111] : memref<16x128xf32, #tpu.memory_space<vmem>> -> memref<1x128xf32, #tpu.memory_space<vmem>>
    %176 = tpu.memref_squeeze %175 : memref<1x128xf32, #tpu.memory_space<vmem>> -> memref<128xf32, #tpu.memory_space<vmem>>
    tpu.wait_dma2 semaphore(%arg4 : memref<!tpu.dma_semaphore, #tpu.memory_space<semaphore_mem>>) src(%174 : memref<128xf32, #tpu.memory_space<any>>) dst(%176 : memref<128xf32, #tpu.memory_space<vmem>>)
    return
  }
  func.func @transform_1(%arg0: i32, %arg1: memref<16xi32, #tpu.memory_space<smem>>) -> (i32, i32) {
    %c0_i32 = arith.constant 0 : i32
    %c0_i32_0 = arith.constant 0 : i32
    return %arg0, %c0_i32 : i32, i32
  }
}

</mosaic_0001>

<llo_original>
// kernel: tpu_custom_call.1
$region0: #{tpu_custom_call.1}
  #allocation0 [shape = 'u32[]', space=smem, size = 0x4, offset = 0x4, fixed_abs, tag = 'smem constant byte address 0x4 - core index']
  #allocation1 [shape = 'u32[144,128]{1,0:T(1,128)}', space=vmem, size = 0x12000, scoped, tag = 'internal scratch']
  #allocation2 [shape = 's32[1]{0}', space=sflag, size = 0x4, scoped, tag = 'scratch operand']
  #allocation3 [shape = 's32[1]{0}', space=sflag, size = 0x4, scoped, tag = 'scoped memory for tpu_custom_call.1']
  #allocation4 [shape = 'u8[512]{0}', space=smem, size = 0x200, scoped, tag = 'prefetched SMEM operand 0']
  #allocation7 [shape = 's32[]', space=sflag, size = 0x4, offset = 0, fixed_abs, tag = 'sflag constant byte address 0x0 - dummy sync flag']
  #allocation8 [shape = 's32[]', space=sflag, size = 0x4, offset = 0, fixed_abs, tag = 'sflag constant byte address 0x0 - dummy sync flag']
  #allocation9 [shape = 'u32[]', space=smem, size = 0x4, offset = 0x44, fixed_abs, tag = 'smem constant byte address 0x44 - assertion arg 0']
  #allocation10 [shape = 'u32[]', space=smem, size = 0x4, offset = 0x48, fixed_abs, tag = 'smem constant byte address 0x48 - assertion arg 1']
  #allocation11 [shape = 's32[]', space=sflag, size = 0x4, offset = 0, fixed_abs, tag = 'sflag constant byte address 0x0 - dummy sync flag']
  #allocation12 [shape = 's32[]', space=sflag, size = 0x4, offset = 0, fixed_abs, tag = 'sflag constant byte address 0x0 - dummy sync flag']
  #allocation13 [shape = 's32[]', space=sflag, size = 0x4, offset = 0, fixed_abs, tag = 'sflag constant byte address 0x0 - dummy sync flag']
  #allocation14 [shape = 's32[]', space=sflag, size = 0x4, offset = 0, fixed_abs, tag = 'sflag constant byte address 0x0 - dummy sync flag']
  #allocation15 [shape = 's32[]', space=sflag, size = 0x4, offset = 0, fixed_abs, tag = 'sflag constant byte address 0x0 - dummy sync flag']
  #allocation16 [shape = 's32[]', space=sflag, size = 0x4, offset = 0, fixed_abs, tag = 'sflag constant byte address 0x0 - dummy sync flag']
  #allocation17 [shape = 's32[]', space=sflag, size = 0x4, offset = 0, fixed_abs, tag = 'sflag constant byte address 0x0 - dummy sync flag']
  #allocation18 [shape = 's32[]', space=sflag, size = 0x4, offset = 0, fixed_abs, tag = 'sflag constant byte address 0x0 - dummy sync flag']
  #allocation19 [shape = 's32[]', space=sflag, size = 0x4, offset = 0, fixed_abs, tag = 'sflag constant byte address 0x0 - dummy sync flag']
  #allocation20 [shape = 's32[]', space=sflag, size = 0x4, offset = 0, fixed_abs, tag = 'sflag constant byte address 0x0 - dummy sync flag']
  #allocation21 [shape = 's32[]', space=sflag, size = 0x4, offset = 0, fixed_abs, tag = 'sflag constant byte address 0x0 - dummy sync flag']
  #allocation22 [shape = 's32[]', space=sflag, size = 0x4, offset = 0, fixed_abs, tag = 'sflag constant byte address 0x0 - dummy sync flag']
  #allocation23 [shape = 's32[]', space=sflag, size = 0x4, offset = 0, fixed_abs, tag = 'sflag constant byte address 0x0 - dummy sync flag']
  #allocation24 [shape = 's32[]', space=sflag, size = 0x4, offset = 0, fixed_abs, tag = 'sflag constant byte address 0x0 - dummy sync flag']
  #allocation25 [shape = 's32[]', space=sflag, size = 0x4, offset = 0, fixed_abs, tag = 'sflag constant byte address 0x0 - dummy sync flag']
  #allocation26 [shape = 's32[]', space=sflag, size = 0x4, offset = 0, fixed_abs, tag = 'sflag constant byte address 0x0 - dummy sync flag']
  #allocation27 [shape = 's32[]', space=sflag, size = 0x4, offset = 0, fixed_abs, tag = 'sflag constant byte address 0x0 - dummy sync flag']
  #allocation28 [shape = 's32[]', space=sflag, size = 0x4, offset = 0, fixed_abs, tag = 'sflag constant byte address 0x0 - dummy sync flag']
  #allocation29 [shape = 's32[]', space=sflag, size = 0x4, offset = 0, fixed_abs, tag = 'sflag constant byte address 0x0 - dummy sync flag']
  #allocation30 [shape = 's32[]', space=sflag, size = 0x4, offset = 0, fixed_abs, tag = 'sflag constant byte address 0x0 - dummy sync flag']
  #allocation31 [shape = 's32[]', space=sflag, size = 0x4, offset = 0, fixed_abs, tag = 'sflag constant byte address 0x0 - dummy sync flag']
  #allocation32 [shape = 's32[]', space=sflag, size = 0x4, offset = 0, fixed_abs, tag = 'sflag constant byte address 0x0 - dummy sync flag']
  #allocation33 [shape = 's32[]', space=sflag, size = 0x4, offset = 0, fixed_abs, tag = 'sflag constant byte address 0x0 - dummy sync flag']
  #allocation34 [shape = 's32[]', space=sflag, size = 0x4, offset = 0, fixed_abs, tag = 'sflag constant byte address 0x0 - dummy sync flag']
  #allocation35 [shape = 's32[]', space=sflag, size = 0x4, offset = 0, fixed_abs, tag = 'sflag constant byte address 0x0 - dummy sync flag']
  #allocation36 [shape = 's32[]', space=sflag, size = 0x4, offset = 0, fixed_abs, tag = 'sflag constant byte address 0x0 - dummy sync flag']
  #allocation37 [shape = 's32[]', space=sflag, size = 0x4, offset = 0, fixed_abs, tag = 'sflag constant byte address 0x0 - dummy sync flag']
  #allocation38 [shape = 's32[]', space=sflag, size = 0x4, offset = 0, fixed_abs, tag = 'sflag constant byte address 0x0 - dummy sync flag']
  #allocation39 [shape = 's32[]', space=sflag, size = 0x4, offset = 0, fixed_abs, tag = 'sflag constant byte address 0x0 - dummy sync flag']
  #allocation40 [shape = 's32[]', space=sflag, size = 0x4, offset = 0, fixed_abs, tag = 'sflag constant byte address 0x0 - dummy sync flag']
  %s0 = inlined_call_operand.hbm [shape: s32[16], index: 0, kind: input, shape index: {}]
  %s1 = inlined_call_operand.hbm [shape: f32[16,128], index: 1, kind: input, shape index: {}]
  %s2 = inlined_call_operand.hbm [shape: f32[16,128], index: 2, kind: output, shape index: {}]
  %s3 = sld [smem:[#allocation0]]
  $region74: #{tpu_custom_call.1} parent=0
    _
  %s5 = ssub.s32 1, %s3
  %s6 = scalar_select 0, %s5, %s3
  %8 = dma.hbm_to_smem %s0, 16, [#allocation4], [#allocation3]
  %9 = dma.done [#allocation3], 16
  %10 = sfence
  $region1: #{tpu_custom_call.1} parent=0
    #allocation5 [shape = 'u8[8192]{0}', space=vmem, size = 0x2000, scoped, tag = 'output window, operand 0, single buffered']
    #allocation6 [shape = 's32[1]{0}', space=sflag, size = 0x4, scoped, tag = 'scoped memory for tpu_custom_call.1']
    %11 = vsyncpa [#allocation6], 0
    %s12 = smul.u32 0, 16
    %s13 = sld [smem:[#allocation4 + %s12]]
    %s14 = smul.addr %s13, 16
    %s15 = scalar_lea.hbm %s1, %s14
    // Predicated region
    $region2: #{tpu_custom_call.1} parent=1 // pred_check
      _
    $region3: #{tpu_custom_call.1} parent=1 // pred_check_branch
      %17 = sbr.rel target = $region5
    $region4: #{tpu_custom_call.1} parent=1 // pred_region
      %18 = sst [smem:[#allocation9]] [#allocation8]
      %19 = sst [smem:[#allocation10]] [#allocation7]
    $region5: #{tpu_custom_call.1} parent=1 // pred_fallthru
      _
    %21 = shalt.err (0)
    %s23 = sshll.u32 [#allocation5], 4
    %s24 = int_to_ptr.vmem [resolvable:$true] %s23
    %26 = dma.hbm_to_vmem [thread:$0]  %s15, 16, %s24, [#allocation2]
    %s27 = sadd.s32 %s12, 1
    %s28 = sld [smem:[#allocation4 + %s27]]
    %s29 = smul.addr %s28, 16
    %s30 = scalar_lea.hbm %s1, %s29
    %s31 = scalar_lea.vmem [#allocation5], 1
    // Predicated region
    $region6: #{tpu_custom_call.1} parent=1 // pred_check
      _
    $region7: #{tpu_custom_call.1} parent=1 // pred_check_branch
      %33 = sbr.rel target = $region9
    $region8: #{tpu_custom_call.1} parent=1 // pred_region
      %34 = sst [smem:[#allocation9]] [#allocation12]
      %35 = sst [smem:[#allocation10]] [#allocation11]
    $region9: #{tpu_custom_call.1} parent=1 // pred_fallthru
      _
    %37 = shalt.err (0)
    %s39 = sshll.u32 %s31, 4
    %s40 = int_to_ptr.vmem [resolvable:$true] %s39
    %42 = dma.hbm_to_vmem [thread:$0]  %s30, 16, %s40, [#allocation2]
    %s43 = sadd.s32 %s12, 2
    %s44 = sld [smem:[#allocation4 + %s43]]
    %s45 = smul.addr %s44, 16
    %s46 = scalar_lea.hbm %s1, %s45
    %s47 = scalar_lea.vmem [#allocation5], 2
    // Predicated region
    $region10: #{tpu_custom_call.1} parent=1 // pred_check
      _
    $region11: #{tpu_custom_call.1} parent=1 // pred_check_branch
      %49 = sbr.rel target = $region13
    $region12: #{tpu_custom_call.1} parent=1 // pred_region
      %50 = sst [smem:[#allocation9]] [#allocation14]
      %51 = sst [smem:[#allocation10]] [#allocation13]
    $region13: #{tpu_custom_call.1} parent=1 // pred_fallthru
      _
    %53 = shalt.err (0)
    %s55 = sshll.u32 %s47, 4
    %s56 = int_to_ptr.vmem [resolvable:$true] %s55
    %58 = dma.hbm_to_vmem [thread:$0]  %s46, 16, %s56, [#allocation2]
    %s59 = sadd.s32 %s12, 3
    %s60 = sld [smem:[#allocation4 + %s59]]
    %s61 = smul.addr %s60, 16
    %s62 = scalar_lea.hbm %s1, %s61
    %s63 = scalar_lea.vmem [#allocation5], 3
    // Predicated region
    $region14: #{tpu_custom_call.1} parent=1 // pred_check
      _
    $region15: #{tpu_custom_call.1} parent=1 // pred_check_branch
      %65 = sbr.rel target = $region17
    $region16: #{tpu_custom_call.1} parent=1 // pred_region
      %66 = sst [smem:[#allocation9]] [#allocation16]
      %67 = sst [smem:[#allocation10]] [#allocation15]
    $region17: #{tpu_custom_call.1} parent=1 // pred_fallthru
      _
    %69 = shalt.err (0)
    %s71 = sshll.u32 %s63, 4
    %s72 = int_to_ptr.vmem [resolvable:$true] %s71
    %74 = dma.hbm_to_vmem [thread:$0]  %s62, 16, %s72, [#allocation2]
    %s75 = sadd.s32 %s12, 4
    %s76 = sld [smem:[#allocation4 + %s75]]
    %s77 = smul.addr %s76, 16
    %s78 = scalar_lea.hbm %s1, %s77
    %s79 = scalar_lea.vmem [#allocation5], 4
    // Predicated region
    $region18: #{tpu_custom_call.1} parent=1 // pred_check
      _
    $region19: #{tpu_custom_call.1} parent=1 // pred_check_branch
      %81 = sbr.rel target = $region21
    $region20: #{tpu_custom_call.1} parent=1 // pred_region
      %82 = sst [smem:[#allocation9]] [#allocation18]
      %83 = sst [smem:[#allocation10]] [#allocation17]
    $region21: #{tpu_custom_call.1} parent=1 // pred_fallthru
      _
    %85 = shalt.err (0)
    %s87 = sshll.u32 %s79, 4
    %s88 = int_to_ptr.vmem [resolvable:$true] %s87
    %90 = dma.hbm_to_vmem [thread:$0]  %s78, 16, %s88, [#allocation2]
    %s91 = sadd.s32 %s12, 5
    %s92 = sld [smem:[#allocation4 + %s91]]
    %s93 = smul.addr %s92, 16
    %s94 = scalar_lea.hbm %s1, %s93
    %s95 = scalar_lea.vmem [#allocation5], 5
    // Predicated region
    $region22: #{tpu_custom_call.1} parent=1 // pred_check
      _
    $region23: #{tpu_custom_call.1} parent=1 // pred_check_branch
      %97 = sbr.rel target = $region25
    $region24: #{tpu_custom_call.1} parent=1 // pred_region
      %98 = sst [smem:[#allocation9]] [#allocation20]
      %99 = sst [smem:[#allocation10]] [#allocation19]
    $region25: #{tpu_custom_call.1} parent=1 // pred_fallthru
      _
    %101 = shalt.err (0)
    %s103 = sshll.u32 %s95, 4
    %s104 = int_to_ptr.vmem [resolvable:$true] %s103
    %106 = dma.hbm_to_vmem [thread:$0]  %s94, 16, %s104, [#allocation2]
    %s107 = sadd.s32 %s12, 6
    %s108 = sld [smem:[#allocation4 + %s107]]
    %s109 = smul.addr %s108, 16
    %s110 = scalar_lea.hbm %s1, %s109
    %s111 = scalar_lea.vmem [#allocation5], 6
    // Predicated region
    $region26: #{tpu_custom_call.1} parent=1 // pred_check
      _
    $region27: #{tpu_custom_call.1} parent=1 // pred_check_branch
      %113 = sbr.rel target = $region29
    $region28: #{tpu_custom_call.1} parent=1 // pred_region
      %114 = sst [smem:[#allocation9]] [#allocation22]
      %115 = sst [smem:[#allocation10]] [#allocation21]
    $region29: #{tpu_custom_call.1} parent=1 // pred_fallthru
      _
    %117 = shalt.err (0)
    %s119 = sshll.u32 %s111, 4
    %s120 = int_to_ptr.vmem [resolvable:$true] %s119
    %122 = dma.hbm_to_vmem [thread:$0]  %s110, 16, %s120, [#allocation2]
    %s123 = sadd.s32 %s12, 7
    %s124 = sld [smem:[#allocation4 + %s123]]
    %s125 = smul.addr %s124, 16
    %s126 = scalar_lea.hbm %s1, %s125
    %s127 = scalar_lea.vmem [#allocation5], 7
    // Predicated region
    $region30: #{tpu_custom_call.1} parent=1 // pred_check
      _
    $region31: #{tpu_custom_call.1} parent=1 // pred_check_branch
      %129 = sbr.rel target = $region33
    $region32: #{tpu_custom_call.1} parent=1 // pred_region
      %130 = sst [smem:[#allocation9]] [#allocation24]
      %131 = sst [smem:[#allocation10]] [#allocation23]
    $region33: #{tpu_custom_call.1} parent=1 // pred_fallthru
      _
    %133 = shalt.err (0)
    %s135 = sshll.u32 %s127, 4
    %s136 = int_to_ptr.vmem [resolvable:$true] %s135
    %138 = dma.hbm_to_vmem [thread:$0]  %s126, 16, %s136, [#allocation2]
    %s139 = sadd.s32 %s12, 8
    %s140 = sld [smem:[#allocation4 + %s139]]
    %s141 = smul.addr %s140, 16
    %s142 = scalar_lea.hbm %s1, %s141
    %s143 = scalar_lea.vmem [#allocation5], 8
    // Predicated region
    $region34: #{tpu_custom_call.1} parent=1 // pred_check
      _
    $region35: #{tpu_custom_call.1} parent=1 // pred_check_branch
      %145 = sbr.rel target = $region37
    $region36: #{tpu_custom_call.1} parent=1 // pred_region
      %146 = sst [smem:[#allocation9]] [#allocation26]
      %147 = sst [smem:[#allocation10]] [#allocation25]
    $region37: #{tpu_custom_call.1} parent=1 // pred_fallthru
      _
    %149 = shalt.err (0)
    %s151 = sshll.u32 %s143, 4
    %s152 = int_to_ptr.vmem [resolvable:$true] %s151
    %154 = dma.hbm_to_vmem [thread:$0]  %s142, 16, %s152, [#allocation2]
    %s155 = sadd.s32 %s12, 9
    %s156 = sld [smem:[#allocation4 + %s155]]
    %s157 = smul.addr %s156, 16
    %s158 = scalar_lea.hbm %s1, %s157
    %s159 = scalar_lea.vmem [#allocation5], 9
    // Predicated region
    $region38: #{tpu_custom_call.1} parent=1 // pred_check
      _
    $region39: #{tpu_custom_call.1} parent=1 // pred_check_branch
      %161 = sbr.rel target = $region41
    $region40: #{tpu_custom_call.1} parent=1 // pred_region
      %162 = sst [smem:[#allocation9]] [#allocation28]
      %163 = sst [smem:[#allocation10]] [#allocation27]
    $region41: #{tpu_custom_call.1} parent=1 // pred_fallthru
      _
    %165 = shalt.err (0)
    %s167 = sshll.u32 %s159, 4
    %s168 = int_to_ptr.vmem [resolvable:$true] %s167
    %170 = dma.hbm_to_vmem [thread:$0]  %s158, 16, %s168, [#allocation2]
    %s171 = sadd.s32 %s12, 10
    %s172 = sld [smem:[#allocation4 + %s171]]
    %s173 = smul.addr %s172, 16
    %s174 = scalar_lea.hbm %s1, %s173
    %s175 = scalar_lea.vmem [#allocation5], 10
    // Predicated region
    $region42: #{tpu_custom_call.1} parent=1 // pred_check
      _
    $region43: #{tpu_custom_call.1} parent=1 // pred_check_branch
      %177 = sbr.rel target = $region45
    $region44: #{tpu_custom_call.1} parent=1 // pred_region
      %178 = sst [smem:[#allocation9]] [#allocation30]
      %179 = sst [smem:[#allocation10]] [#allocation29]
    $region45: #{tpu_custom_call.1} parent=1 // pred_fallthru
      _
    %181 = shalt.err (0)
    %s183 = sshll.u32 %s175, 4
    %s184 = int_to_ptr.vmem [resolvable:$true] %s183
    %186 = dma.hbm_to_vmem [thread:$0]  %s174, 16, %s184, [#allocation2]
    %s187 = sadd.s32 %s12, 11
    %s188 = sld [smem:[#allocation4 + %s187]]
    %s189 = smul.addr %s188, 16
    %s190 = scalar_lea.hbm %s1, %s189
    %s191 = scalar_lea.vmem [#allocation5], 11
    // Predicated region
    $region46: #{tpu_custom_call.1} parent=1 // pred_check
      _
    $region47: #{tpu_custom_call.1} parent=1 // pred_check_branch
      %193 = sbr.rel target = $region49
    $region48: #{tpu_custom_call.1} parent=1 // pred_region
      %194 = sst [smem:[#allocation9]] [#allocation32]
      %195 = sst [smem:[#allocation10]] [#allocation31]
    $region49: #{tpu_custom_call.1} parent=1 // pred_fallthru
      _
    %197 = shalt.err (0)
    %s199 = sshll.u32 %s191, 4
    %s200 = int_to_ptr.vmem [resolvable:$true] %s199
    %202 = dma.hbm_to_vmem [thread:$0]  %s190, 16, %s200, [#allocation2]
    %s203 = sadd.s32 %s12, 12
    %s204 = sld [smem:[#allocation4 + %s203]]
    %s205 = smul.addr %s204, 16
    %s206 = scalar_lea.hbm %s1, %s205
    %s207 = scalar_lea.vmem [#allocation5], 12
    // Predicated region
    $region50: #{tpu_custom_call.1} parent=1 // pred_check
      _
    $region51: #{tpu_custom_call.1} parent=1 // pred_check_branch
      %209 = sbr.rel target = $region53
    $region52: #{tpu_custom_call.1} parent=1 // pred_region
      %210 = sst [smem:[#allocation9]] [#allocation34]
      %211 = sst [smem:[#allocation10]] [#allocation33]
    $region53: #{tpu_custom_call.1} parent=1 // pred_fallthru
      _
    %213 = shalt.err (0)
    %s215 = sshll.u32 %s207, 4
    %s216 = int_to_ptr.vmem [resolvable:$true] %s215
    %218 = dma.hbm_to_vmem [thread:$0]  %s206, 16, %s216, [#allocation2]
    %s219 = sadd.s32 %s12, 13
    %s220 = sld [smem:[#allocation4 + %s219]]
    %s221 = smul.addr %s220, 16
    %s222 = scalar_lea.hbm %s1, %s221
    %s223 = scalar_lea.vmem [#allocation5], 13
    // Predicated region
    $region54: #{tpu_custom_call.1} parent=1 // pred_check
      _
    $region55: #{tpu_custom_call.1} parent=1 // pred_check_branch
      %225 = sbr.rel target = $region57
    $region56: #{tpu_custom_call.1} parent=1 // pred_region
      %226 = sst [smem:[#allocation9]] [#allocation36]
      %227 = sst [smem:[#allocation10]] [#allocation35]
    $region57: #{tpu_custom_call.1} parent=1 // pred_fallthru
      _
    %229 = shalt.err (0)
    %s231 = sshll.u32 %s223, 4
    %s232 = int_to_ptr.vmem [resolvable:$true] %s231
    %234 = dma.hbm_to_vmem [thread:$0]  %s222, 16, %s232, [#allocation2]
    %s235 = sadd.s32 %s12, 14
    %s236 = sld [smem:[#allocation4 + %s235]]
    %s237 = smul.addr %s236, 16
    %s238 = scalar_lea.hbm %s1, %s237
    %s239 = scalar_lea.vmem [#allocation5], 14
    // Predicated region
    $region58: #{tpu_custom_call.1} parent=1 // pred_check
      _
    $region59: #{tpu_custom_call.1} parent=1 // pred_check_branch
      %241 = sbr.rel target = $region61
    $region60: #{tpu_custom_call.1} parent=1 // pred_region
      %242 = sst [smem:[#allocation9]] [#allocation38]
      %243 = sst [smem:[#allocation10]] [#allocation37]
    $region61: #{tpu_custom_call.1} parent=1 // pred_fallthru
      _
    %245 = shalt.err (0)
    %s247 = sshll.u32 %s239, 4
    %s248 = int_to_ptr.vmem [resolvable:$true] %s247
    %250 = dma.hbm_to_vmem [thread:$0]  %s238, 16, %s248, [#allocation2]
    %s251 = sadd.s32 %s12, 15
    %s252 = sld [smem:[#allocation4 + %s251]]
    %s253 = smul.addr %s252, 16
    %s254 = scalar_lea.hbm %s1, %s253
    %s255 = scalar_lea.vmem [#allocation5], 15
    // Predicated region
    $region62: #{tpu_custom_call.1} parent=1 // pred_check
      _
    $region63: #{tpu_custom_call.1} parent=1 // pred_check_branch
      %257 = sbr.rel target = $region65
    $region64: #{tpu_custom_call.1} parent=1 // pred_region
      %258 = sst [smem:[#allocation9]] [#allocation40]
      %259 = sst [smem:[#allocation10]] [#allocation39]
    $region65: #{tpu_custom_call.1} parent=1 // pred_fallthru
      _
    %261 = shalt.err (0)
    %s263 = sshll.u32 %s255, 4
    %s264 = int_to_ptr.vmem [resolvable:$true] %s263
    %266 = dma.hbm_to_vmem [thread:$0]  %s254, 16, %s264, [#allocation2]
    %268 = dma.done [#allocation2], 16
    %270 = dma.done [#allocation2], 16
    %272 = dma.done [#allocation2], 16
    %274 = dma.done [#allocation2], 16
    %276 = dma.done [#allocation2], 16
    %278 = dma.done [#allocation2], 16
    %280 = dma.done [#allocation2], 16
    %282 = dma.done [#allocation2], 16
    %284 = dma.done [#allocation2], 16
    %286 = dma.done [#allocation2], 16
    %288 = dma.done [#allocation2], 16
    %290 = dma.done [#allocation2], 16
    %292 = dma.done [#allocation2], 16
    %294 = dma.done [#allocation2], 16
    %296 = dma.done [#allocation2], 16
    %298 = dma.done [#allocation2], 16
    // Predicated region
    $region66: #{tpu_custom_call.1} parent=1 // pred_check
      _
    $region67: #{tpu_custom_call.1} parent=1 // pred_check_branch
      %300 = sbr.rel (0) target = $region69
    $region68: #{tpu_custom_call.1} parent=1 // pred_region
      %s302 = ssub.s32 256, 256
      %303 = vsyncadd [#allocation6], %s302
      %s304 = sshll.u32 [#allocation5], 4
      %s305 = int_to_ptr.vmem [resolvable:$true] %s304
      %310 = dma.vmem_to_hbm [thread:$0]  %s305, 256, %s2, [#allocation6], 128, 128, 8
    $region69: #{tpu_custom_call.1} parent=1 // pred_fallthru
      _
    // Predicated region
    $region70: #{tpu_custom_call.1} parent=1 // pred_check
      _
    $region71: #{tpu_custom_call.1} parent=1 // pred_check_branch
      %312 = sbr.rel (0) target = $region73
    $region72: #{tpu_custom_call.1} parent=1 // pred_region
      %313 = dma.done [#allocation6], 256
    $region73: #{tpu_custom_call.1} parent=1 // pred_fallthru
      _
    %314 = vsyncpa [#allocation6], 1
  %315 = vsyncmov [#allocation2]
  %s316 = vpop.sfrf %315
  %p317 = scmp.eq.s32.totalorder %s316, 0
  %p318 = pneg %p317
  %320 = shalt.err (%p318)

</llo_original>
